<compile_context>
chip_gen: v6e
topology: v6e:2x2x1
jax: 0.10.0
libtpu: 0.0.40
codegen_flags: <defaults>
</compile_context>

<pallas_src>
import functools

import numpy as np
import jax
import jax.numpy as jnp
from jax import lax
from jax.experimental import pallas as pl
from jax.experimental.pallas import tpu as pltpu

L_IN = 8                 # input length (forced by fc1 = Linear(64*4, 64) with pool/2)
C1, C2 = 32, 64          # conv channels
L_POOL = L_IN // 2       # 4
HALF = C1 * L_POOL       # 128  (pooled feature width)
N2 = C2 * L_POOL         # 256  (conv2 flattened width, PyTorch flatten order c*4+l)
NOUT = 3
NOUT_PAD = 8             # fc2 output padded to 8 lanes (full-dim block; small writeback)


def _round_up(n, m):
    return -(-n // m) * m


def circular_cnn_kernel(x_ref, w1_ref, b1_ref, w2_ref, b2_ref,
                        fw1_ref, fb1_ref, fw2_ref, fb2_ref, out_ref):
    f32 = jnp.float32
    bf16 = jnp.bfloat16

    # conv1 + bias + ReLU. x is already bf16; weights bf16, accumulate in f32.
    # Columns = [even positions | odd positions], each c*L_POOL + m.
    y1 = jnp.dot(x_ref[...], w1_ref[...], preferred_element_type=f32) + b1_ref[...]
    y1 = jnp.maximum(y1, 0.0)                                    # (TB, 256) f32

    # maxpool(2): elementwise max of the two 128-lane-aligned halves (VPU only).
    p = jnp.maximum(y1[:, :HALF], y1[:, HALF:]).astype(bf16)     # (TB, 128) bf16

    # conv2 + bias + ReLU; output columns already in PyTorch flatten order c*4+l.
    y2 = jnp.dot(p, w2_ref[...], preferred_element_type=f32) + b2_ref[...]
    y2 = jnp.maximum(y2, 0.0).astype(bf16)                       # (TB, 256) bf16

    # fc1 + ReLU
    h = jnp.dot(y2, fw1_ref[...], preferred_element_type=f32) + fb1_ref[...]
    h = jnp.maximum(h, 0.0).astype(bf16)                         # (TB, 64) bf16

    # fc2 (padded to 8 output lanes), stored in f32.
    out_ref[...] = jnp.dot(h, fw2_ref[...],
                           preferred_element_type=f32) + fb2_ref[...]


def pack_params(params):
    """Fold conv taps / zero padding / pooling layout into dense GEMM matrices.

    Call ONCE at init; the packed tuple is reused by every forward call.
    GEMM weights are returned in bf16 (MXU operands); biases stay f32.
    """
    w1, b1, w2, b2, fw1, fb1, fw2, fb2 = params

    # conv1 -> dense (8, 256). Column layout: [even-position half | odd-position
    # half]; within a half, column index = c*L_POOL + m (position l = 2m(+half)).
    rows, cols, cs, ks = [], [], [], []
    for half, off in ((0, 0), (1, HALF)):
        for c in range(C1):
            for m in range(L_POOL):
                l = 2 * m + half
                for k in range(3):
                    i = l + k - 1                       # zero padding: drop OOB taps
                    if 0 <= i < L_IN:
                        rows.append(i)
                        cols.append(off + c * L_POOL + m)
                        cs.append(c)
                        ks.append(k)
    w1eff = jnp.zeros((L_IN, 2 * HALF), jnp.float32).at[
        np.asarray(rows), np.asarray(cols)].set(
        w1[np.asarray(cs), 0, np.asarray(ks)]).astype(jnp.bfloat16)
    b1row = jnp.tile(jnp.repeat(b1, L_POOL), 2).reshape(1, 2 * HALF)

    # conv2 -> dense (128, 256). Rows = c_in*4 + m (pooled layout), cols = c_out*4
    # + l (PyTorch flatten order of (C2, L_POOL)).
    rows, cols, co, ci, ks = [], [], [], [], []
    for c_out in range(C2):
        for c_in in range(C1):
            for l in range(L_POOL):
                for k in range(3):
                    m = l + k - 1
                    if 0 <= m < L_POOL:
                        rows.append(c_in * L_POOL + m)
                        cols.append(c_out * L_POOL + l)
                        co.append(c_out)
                        ci.append(c_in)
                        ks.append(k)
    w2eff = jnp.zeros((HALF, N2), jnp.float32).at[
        np.asarray(rows), np.asarray(cols)].set(
        w2[np.asarray(co), np.asarray(ci), np.asarray(ks)]).astype(jnp.bfloat16)
    b2row = jnp.repeat(b2, L_POOL).reshape(1, N2)

    fw1t = fw1.T.astype(jnp.bfloat16)                   # (256, 64)
    fb1row = fb1.reshape(1, C2)
    fw2pad = jnp.zeros((C2, NOUT_PAD), jnp.float32).at[:, :NOUT].set(
        fw2.T).astype(jnp.bfloat16)
    fb2pad = jnp.zeros((1, NOUT_PAD), jnp.float32).at[0, :NOUT].set(fb2)
    return (w1eff, b1row, w2eff, b2row, fw1t, fb1row, fw2pad, fb2pad)


def circular_cnn_forward(x, packed, tile_b=2048):
    """x: (B, 1, 8) float32 NCW (like PyTorch). packed: pack_params(params).
    Returns (B, 3) float32."""
    B = x.shape[0]
    x2 = x[:, 0, :].astype(jnp.bfloat16)                # (B, 8) bf16

    # Batch tile: multiple of 8 sublanes; don't over-pad tiny batches; when the
    # batch is big enough, keep >= 2 grid steps so v7x can use both TensorCores.
    b8 = _round_up(B, 8)
    tb = _round_up(min(int(tile_b), b8), 8)
    if b8 > 8 and _round_up(b8, tb) // tb < 2:
        tb = _round_up(max(8, tb // 2), 8)
    bp = _round_up(B, tb)
    if bp != B:
        x2 = jnp.pad(x2, ((0, bp - B), (0, 0)))

    flops = 2 * bp * (L_IN * 2 * HALF + HALF * N2 + N2 * C2 + C2 * NOUT_PAD)
    weight_bytes = sum(int(np.prod(p.shape)) * p.dtype.itemsize for p in packed)
    bytes_accessed = bp * L_IN * 2 + bp * NOUT_PAD * 4 + weight_bytes

    grid_spec = pltpu.PrefetchScalarGridSpec(
        num_scalar_prefetch=0,
        grid=(bp // tb,),
        in_specs=[pl.BlockSpec((tb, L_IN), lambda i: (i, 0))]
                 + [pl.BlockSpec(p.shape, lambda i: (0, 0)) for p in packed],
        out_specs=pl.BlockSpec((tb, NOUT_PAD), lambda i: (i, 0)),
    )
    out = pl.pallas_call(
        circular_cnn_kernel,
        out_shape=jax.ShapeDtypeStruct((bp, NOUT_PAD), jnp.float32),
        grid_spec=grid_spec,
        compiler_params=pltpu.CompilerParams(
            dimension_semantics=("parallel",),
            vmem_limit_bytes=48 << 20),
        cost_estimate=pl.CostEstimate(flops=flops, transcendentals=0,
                                      bytes_accessed=bytes_accessed),
    )(x2, *packed)
    return out[:B, :NOUT]


def reference_forward(x, params):
    """Pure-JAX f32 reference mirroring the PyTorch forward."""
    w1, b1, w2, b2, fw1, fb1, fw2, fb2 = params
    dn = ('NCH', 'OIH', 'NCH')
    y = lax.conv_general_dilated(x, w1, (1,), [(1, 1)], dimension_numbers=dn)
    y = jax.nn.relu(y + b1[None, :, None])
    bb, cc, ll = y.shape
    y = y.reshape(bb, cc, ll // 2, 2).max(axis=-1)
    y = lax.conv_general_dilated(y, w2, (1,), [(1, 1)], dimension_numbers=dn)
    y = jax.nn.relu(y + b2[None, :, None])
    y = y.reshape(bb, -1)
    y = jax.nn.relu(y @ fw1.T + fb1)
    return y @ fw2.T + fb2


def init_params(key):
    """Deterministic init (PyTorch-default-style uniform bounds)."""
    ks = jax.random.split(key, 8)

    def u(k, shape, fan_in):
        bound = 1.0 / np.sqrt(fan_in)
        return jax.random.uniform(k, shape, jnp.float32, -bound, bound)

    w1 = u(ks[0], (C1, 1, 3), 1 * 3)
    b1 = u(ks[1], (C1,), 1 * 3)
    w2 = u(ks[2], (C2, C1, 3), C1 * 3)
    b2 = u(ks[3], (C2,), C1 * 3)
    fw1 = u(ks[4], (C2, C2 * L_POOL), C2 * L_POOL)
    fb1 = u(ks[5], (C2,), C2 * L_POOL)
    fw2 = u(ks[6], (3, C2), C2)
    fb2 = u(ks[7], (3,), C2)
    return (w1, b1, w2, b2, fw1, fb1, fw2, fb2)


if __name__ == "__main__":
    key = jax.random.PRNGKey(0)
    pkey, xkey = jax.random.split(key)
    params = init_params(pkey)
    packed = pack_params(params)        # packed ONCE at init (hoisted out of fwd)

    B = 2
    x = jax.random.normal(xkey, (B, 1, L_IN), jnp.float32)   # NCW, like PyTorch

    fwd = jax.jit(functools.partial(circular_cnn_forward, packed=packed))
    out = jax.block_until_ready(fwd(x))
    ref = jax.block_until_ready(reference_forward(x, params))
    # bf16 GEMM operands (f32 accumulation) vs. f32 reference -> loosened tolerance.
    np.testing.assert_allclose(np.asarray(out), np.asarray(ref),
                               rtol=5e-2, atol=5e-2)
    print("KERNEL_OK")
</pallas_src>

<mosaic_0001>
module attributes {stable_mosaic.version = 11 : i64} {
  func.func @circular_cnn_kernel(%arg0: i32, %arg1: memref<8x8xbf16, #tpu.memory_space<vmem>>, %arg2: memref<8x256xbf16, #tpu.memory_space<vmem>>, %arg3: memref<1x256xf32, #tpu.memory_space<vmem>>, %arg4: memref<128x256xbf16, #tpu.memory_space<vmem>>, %arg5: memref<1x256xf32, #tpu.memory_space<vmem>>, %arg6: memref<256x64xbf16, #tpu.memory_space<vmem>>, %arg7: memref<1x64xf32, #tpu.memory_space<vmem>>, %arg8: memref<64x8xbf16, #tpu.memory_space<vmem>>, %arg9: memref<1x8xf32, #tpu.memory_space<vmem>>, %arg10: memref<8x8xf32, #tpu.memory_space<vmem>>) attributes {dimension_semantics = [#tpu.dimension_semantics<parallel>], iteration_bounds = array<i64: 1>, scalar_prefetch = 0 : i64, scratch_operands = 0 : i64, tpu.core_type = #tpu.core_type<tc>, window_params = [{transform_indices = @transform_0, window_bounds = array<i64: 8, 8>}, {pipeline_mode = #tpu.pipeline_mode<synchronous>, transform_indices = @transform_1, window_bounds = array<i64: 8, 256>}, {pipeline_mode = #tpu.pipeline_mode<synchronous>, transform_indices = @transform_2, window_bounds = array<i64: 1, 256>}, {pipeline_mode = #tpu.pipeline_mode<synchronous>, transform_indices = @transform_3, window_bounds = array<i64: 128, 256>}, {pipeline_mode = #tpu.pipeline_mode<synchronous>, transform_indices = @transform_4, window_bounds = array<i64: 1, 256>}, {pipeline_mode = #tpu.pipeline_mode<synchronous>, transform_indices = @transform_5, window_bounds = array<i64: 256, 64>}, {pipeline_mode = #tpu.pipeline_mode<synchronous>, transform_indices = @transform_6, window_bounds = array<i64: 1, 64>}, {pipeline_mode = #tpu.pipeline_mode<synchronous>, transform_indices = @transform_7, window_bounds = array<i64: 64, 8>}, {pipeline_mode = #tpu.pipeline_mode<synchronous>, transform_indices = @transform_8, window_bounds = array<i64: 1, 8>}, {transform_indices = @transform_9, window_bounds = array<i64: 8, 8>}]} {
    %c0 = arith.constant 0 : index
    %c0_0 = arith.constant 0 : index
    %0 = vector.load %arg1[%c0, %c0_0] : memref<8x8xbf16, #tpu.memory_space<vmem>>, vector<8x8xbf16>
    %c0_1 = arith.constant 0 : index
    %c0_2 = arith.constant 0 : index
    %1 = vector.load %arg2[%c0_1, %c0_2] : memref<8x256xbf16, #tpu.memory_space<vmem>>, vector<8x256xbf16>
    %cst = arith.constant dense<0.000000e+00> : vector<8x256xf32>
    %2 = tpu.matmul %0, %1, %cst {dimension_numbers = #tpu.dot_dimension_numbers<[1], [0], [0], [1], [0, 0, 1, 1], [], []>} : vector<8x8xbf16>, vector<8x256xbf16>, vector<8x256xf32> -> vector<8x256xf32>
    %c0_3 = arith.constant 0 : index
    %c0_4 = arith.constant 0 : index
    %3 = vector.load %arg3[%c0_3, %c0_4] : memref<1x256xf32, #tpu.memory_space<vmem>>, vector<1x256xf32>
    %4 = vector.broadcast %3 : vector<1x256xf32> to vector<8x256xf32>
    %5 = arith.addf %2, %4 : vector<8x256xf32>
    %cst_5 = arith.constant 0.000000e+00 : f32
    %6 = vector.broadcast %cst_5 : f32 to vector<8x256xf32>
    %7 = arith.maximumf %5, %6 : vector<8x256xf32>
    %8 = vector.extract_strided_slice %7 {offsets = [0, 0], sizes = [8, 128], strides = [1, 1]} : vector<8x256xf32> to vector<8x128xf32>
    %9 = vector.extract_strided_slice %7 {offsets = [0, 128], sizes = [8, 128], strides = [1, 1]} : vector<8x256xf32> to vector<8x128xf32>
    %10 = arith.maximumf %8, %9 : vector<8x128xf32>
    %11 = arith.truncf %10 : vector<8x128xf32> to vector<8x128xbf16>
    %c0_6 = arith.constant 0 : index
    %c0_7 = arith.constant 0 : index
    %12 = vector.load %arg4[%c0_6, %c0_7] : memref<128x256xbf16, #tpu.memory_space<vmem>>, vector<128x256xbf16>
    %cst_8 = arith.constant dense<0.000000e+00> : vector<8x256xf32>
    %13 = tpu.matmul %11, %12, %cst_8 {dimension_numbers = #tpu.dot_dimension_numbers<[1], [0], [0], [1], [0, 0, 1, 1], [], []>} : vector<8x128xbf16>, vector<128x256xbf16>, vector<8x256xf32> -> vector<8x256xf32>
    %c0_9 = arith.constant 0 : index
    %c0_10 = arith.constant 0 : index
    %14 = vector.load %arg5[%c0_9, %c0_10] : memref<1x256xf32, #tpu.memory_space<vmem>>, vector<1x256xf32>
    %15 = vector.broadcast %14 : vector<1x256xf32> to vector<8x256xf32>
    %16 = arith.addf %13, %15 : vector<8x256xf32>
    %cst_11 = arith.constant 0.000000e+00 : f32
    %17 = vector.broadcast %cst_11 : f32 to vector<8x256xf32>
    %18 = arith.maximumf %16, %17 : vector<8x256xf32>
    %19 = arith.truncf %18 : vector<8x256xf32> to vector<8x256xbf16>
    %c0_12 = arith.constant 0 : index
    %c0_13 = arith.constant 0 : index
    %20 = vector.load %arg6[%c0_12, %c0_13] : memref<256x64xbf16, #tpu.memory_space<vmem>>, vector<256x64xbf16>
    %cst_14 = arith.constant dense<0.000000e+00> : vector<8x64xf32>
    %21 = tpu.matmul %19, %20, %cst_14 {dimension_numbers = #tpu.dot_dimension_numbers<[1], [0], [0], [1], [0, 0, 1, 1], [], []>} : vector<8x256xbf16>, vector<256x64xbf16>, vector<8x64xf32> -> vector<8x64xf32>
    %c0_15 = arith.constant 0 : index
    %c0_16 = arith.constant 0 : index
    %22 = vector.load %arg7[%c0_15, %c0_16] : memref<1x64xf32, #tpu.memory_space<vmem>>, vector<1x64xf32>
    %23 = vector.broadcast %22 : vector<1x64xf32> to vector<8x64xf32>
    %24 = arith.addf %21, %23 : vector<8x64xf32>
    %cst_17 = arith.constant 0.000000e+00 : f32
    %25 = vector.broadcast %cst_17 : f32 to vector<8x64xf32>
    %26 = arith.maximumf %24, %25 : vector<8x64xf32>
    %27 = arith.truncf %26 : vector<8x64xf32> to vector<8x64xbf16>
    %c0_18 = arith.constant 0 : index
    %c0_19 = arith.constant 0 : index
    %28 = vector.load %arg8[%c0_18, %c0_19] : memref<64x8xbf16, #tpu.memory_space<vmem>>, vector<64x8xbf16>
    %cst_20 = arith.constant dense<0.000000e+00> : vector<8x8xf32>
    %29 = tpu.matmul %27, %28, %cst_20 {dimension_numbers = #tpu.dot_dimension_numbers<[1], [0], [0], [1], [0, 0, 1, 1], [], []>} : vector<8x64xbf16>, vector<64x8xbf16>, vector<8x8xf32> -> vector<8x8xf32>
    %c0_21 = arith.constant 0 : index
    %c0_22 = arith.constant 0 : index
    %30 = vector.load %arg9[%c0_21, %c0_22] : memref<1x8xf32, #tpu.memory_space<vmem>>, vector<1x8xf32>
    %31 = vector.broadcast %30 : vector<1x8xf32> to vector<8x8xf32>
    %32 = arith.addf %29, %31 : vector<8x8xf32>
    %c0_23 = arith.constant 0 : index
    %c0_24 = arith.constant 0 : index
    %33 = vector.load %arg10[%c0_23, %c0_24] : memref<8x8xf32, #tpu.memory_space<vmem>>, vector<8x8xf32>
    tpu.vector_store %arg10[%c0_23, %c0_24], %32 {strides = array<i32>} : memref<8x8xf32, #tpu.memory_space<vmem>>, vector<8x8xf32>,
    return
  }
  func.func @transform_0(%arg0: i32) -> (i32, i32) {
    %c0_i32 = arith.constant 0 : i32
    %c0_i32_0 = arith.constant 0 : i32
    return %arg0, %c0_i32 : i32, i32
  }
  func.func @transform_1(%arg0: i32) -> (i32, i32) {
    %c0_i32 = arith.constant 0 : i32
    %c0_i32_0 = arith.constant 0 : i32
    %c0_i32_1 = arith.constant 0 : i32
    return %c0_i32, %c0_i32_0 : i32, i32
  }
  func.func @transform_2(%arg0: i32) -> (i32, i32) {
    %c0_i32 = arith.constant 0 : i32
    %c0_i32_0 = arith.constant 0 : i32
    %c0_i32_1 = arith.constant 0 : i32
    return %c0_i32, %c0_i32_0 : i32, i32
  }
  func.func @transform_3(%arg0: i32) -> (i32, i32) {
    %c0_i32 = arith.constant 0 : i32
    %c0_i32_0 = arith.constant 0 : i32
    %c0_i32_1 = arith.constant 0 : i32
    return %c0_i32, %c0_i32_0 : i32, i32
  }
  func.func @transform_4(%arg0: i32) -> (i32, i32) {
    %c0_i32 = arith.constant 0 : i32
    %c0_i32_0 = arith.constant 0 : i32
    %c0_i32_1 = arith.constant 0 : i32
    return %c0_i32, %c0_i32_0 : i32, i32
  }
  func.func @transform_5(%arg0: i32) -> (i32, i32) {
    %c0_i32 = arith.constant 0 : i32
    %c0_i32_0 = arith.constant 0 : i32
    %c0_i32_1 = arith.constant 0 : i32
    return %c0_i32, %c0_i32_0 : i32, i32
  }
  func.func @transform_6(%arg0: i32) -> (i32, i32) {
    %c0_i32 = arith.constant 0 : i32
    %c0_i32_0 = arith.constant 0 : i32
    %c0_i32_1 = arith.constant 0 : i32
    return %c0_i32, %c0_i32_0 : i32, i32
  }
  func.func @transform_7(%arg0: i32) -> (i32, i32) {
    %c0_i32 = arith.constant 0 : i32
    %c0_i32_0 = arith.constant 0 : i32
    %c0_i32_1 = arith.constant 0 : i32
    return %c0_i32, %c0_i32_0 : i32, i32
  }
  func.func @transform_8(%arg0: i32) -> (i32, i32) {
    %c0_i32 = arith.constant 0 : i32
    %c0_i32_0 = arith.constant 0 : i32
    %c0_i32_1 = arith.constant 0 : i32
    return %c0_i32, %c0_i32_0 : i32, i32
  }
  func.func @transform_9(%arg0: i32) -> (i32, i32) {
    %c0_i32 = arith.constant 0 : i32
    %c0_i32_0 = arith.constant 0 : i32
    return %arg0, %c0_i32 : i32, i32
  }
}

</mosaic_0001>

<llo_original>
// kernel: circular_cnn_forward.1
$region0: #{circular_cnn_forward.1}
  #allocation0 [shape = 'u32[]', space=smem, size = 0x4, offset = 0x4, fixed_abs, tag = 'smem constant byte address 0x4 - core index']
  #allocation1 [shape = 'u32[144,128]{1,0:T(1,128)}', space=vmem, size = 0x12000, scoped, tag = 'internal scratch']
  %s0 = inlined_call_operand.vmem [shape: bf16[8,8], index: 0, kind: input, shape index: {}]
  %s1 = inlined_call_operand.vmem [shape: bf16[8,256], index: 1, kind: input, shape index: {}]
  %s2 = inlined_call_operand.vmem [shape: f32[1,256], index: 2, kind: input, shape index: {}]
  %s3 = inlined_call_operand.hbm [shape: bf16[128,256], index: 3, kind: input, shape index: {}]
  %s4 = inlined_call_operand.vmem [shape: f32[1,256], index: 4, kind: input, shape index: {}]
  %s5 = inlined_call_operand.hbm [shape: bf16[256,64], index: 5, kind: input, shape index: {}]
  %s6 = inlined_call_operand.vmem [shape: f32[1,64], index: 6, kind: input, shape index: {}]
  %s7 = inlined_call_operand.hbm [shape: bf16[64,8], index: 7, kind: input, shape index: {}]
  %s8 = inlined_call_operand.vmem [shape: f32[1,8], index: 8, kind: input, shape index: {}]
  %s9 = inlined_call_operand.vmem [shape: f32[8,8], index: 9, kind: output, shape index: {}]
  %s10 = sld [smem:[#allocation0]]
  $region58: #{circular_cnn_forward.1} parent=0
    _
  %s12 = ssub.s32 1, %s10
  %s13 = scalar_select 0, %s12, %s10
  $region1: #{circular_cnn_forward.1} parent=0
    #allocation2 [shape = 'u8[65536]{0}', space=vmem, size = 0x10000, scoped, tag = 'input window, operand 3, single buffered']
    #allocation3 [shape = 's32[1]{0}', space=sflag, size = 0x4, scoped, tag = 'scoped memory for circular_cnn_forward.1']
    #allocation4 [shape = 'u8[65536]{0}', space=vmem, size = 0x10000, scoped, tag = 'input window, operand 5, single buffered']
    #allocation5 [shape = 's32[1]{0}', space=sflag, size = 0x4, scoped, tag = 'scoped memory for circular_cnn_forward.1']
    #allocation6 [shape = 'u8[16384]{0}', space=vmem, size = 0x4000, scoped, tag = 'input window, operand 7, single buffered']
    %14 = vsyncpa [#allocation3], 0
    %15 = vsyncpa [#allocation5], 0
    // Predicated region
    $region2: #{circular_cnn_forward.1} parent=1 // pred_check
      _
    $region3: #{circular_cnn_forward.1} parent=1 // pred_check_branch
      %17 = sbr.rel (0) target = $region5
    $region4: #{circular_cnn_forward.1} parent=1 // pred_region
      _
    $region5: #{circular_cnn_forward.1} parent=1 // pred_fallthru
      _
    // Predicated region
    $region6: #{circular_cnn_forward.1} parent=1 // pred_check
      _
    $region7: #{circular_cnn_forward.1} parent=1 // pred_check_branch
      %19 = sbr.rel (0) target = $region9
    $region8: #{circular_cnn_forward.1} parent=1 // pred_region
      _
    $region9: #{circular_cnn_forward.1} parent=1 // pred_fallthru
      _
    // Predicated region
    $region10: #{circular_cnn_forward.1} parent=1 // pred_check
      _
    $region11: #{circular_cnn_forward.1} parent=1 // pred_check_branch
      %21 = sbr.rel (0) target = $region13
    $region12: #{circular_cnn_forward.1} parent=1 // pred_region
      _
    $region13: #{circular_cnn_forward.1} parent=1 // pred_fallthru
      _
    // Predicated region
    $region14: #{circular_cnn_forward.1} parent=1 // pred_check
      _
    $region15: #{circular_cnn_forward.1} parent=1 // pred_check_branch
      %23 = sbr.rel (0) target = $region17
    $region16: #{circular_cnn_forward.1} parent=1 // pred_region
      %s25 = ssub.s32 2048, 2048
      %26 = vsyncadd [#allocation3], %s25
      %s27 = sshll.u32 [#allocation2], 4
      %s28 = int_to_ptr.vmem [resolvable:$true] %s27
      %33 = dma.hbm_to_vmem [thread:$0]  %s3, 2048, %s28, [#allocation3], 128, 128, 8
    $region17: #{circular_cnn_forward.1} parent=1 // pred_fallthru
      _
    // Predicated region
    $region18: #{circular_cnn_forward.1} parent=1 // pred_check
      _
    $region19: #{circular_cnn_forward.1} parent=1 // pred_check_branch
      %35 = sbr.rel (0) target = $region21
    $region20: #{circular_cnn_forward.1} parent=1 // pred_region
      _
    $region21: #{circular_cnn_forward.1} parent=1 // pred_fallthru
      _
    // Predicated region
    $region22: #{circular_cnn_forward.1} parent=1 // pred_check
      _
    $region23: #{circular_cnn_forward.1} parent=1 // pred_check_branch
      %37 = sbr.rel (0) target = $region25
    $region24: #{circular_cnn_forward.1} parent=1 // pred_region
      %s39 = ssub.s32 2048, 2048
      %40 = vsyncadd [#allocation5], %s39
      %s41 = sshll.u32 [#allocation4], 4
      %s42 = int_to_ptr.vmem [resolvable:$true] %s41
      %47 = dma.hbm_to_vmem [thread:$0]  %s5, 2048, %s42, [#allocation5], 64, 64, 4
    $region25: #{circular_cnn_forward.1} parent=1 // pred_fallthru
      _
    // Predicated region
    $region26: #{circular_cnn_forward.1} parent=1 // pred_check
      _
    $region27: #{circular_cnn_forward.1} parent=1 // pred_check_branch
      %49 = sbr.rel (0) target = $region29
    $region28: #{circular_cnn_forward.1} parent=1 // pred_region
      _
    $region29: #{circular_cnn_forward.1} parent=1 // pred_fallthru
      _
    // Predicated region
    $region30: #{circular_cnn_forward.1} parent=1 // pred_check
      _
    $region31: #{circular_cnn_forward.1} parent=1 // pred_check_branch
      %51 = sbr.rel (0) target = $region33
    $region32: #{circular_cnn_forward.1} parent=1 // pred_region
      %s53 = ssub.s32 512, 512
      %54 = vsyncadd [#allocation5], %s53
      %s55 = sshll.u32 [#allocation6], 4
      %s56 = int_to_ptr.vmem [resolvable:$true] %s55
      %61 = dma.hbm_to_vmem [thread:$0]  %s7, 512, %s56, [#allocation5], 64, 64, 4
    $region33: #{circular_cnn_forward.1} parent=1 // pred_fallthru
      _
    // Predicated region
    $region34: #{circular_cnn_forward.1} parent=1 // pred_check
      _
    $region35: #{circular_cnn_forward.1} parent=1 // pred_check_branch
      %63 = sbr.rel (0) target = $region37
    $region36: #{circular_cnn_forward.1} parent=1 // pred_region
      _
    $region37: #{circular_cnn_forward.1} parent=1 // pred_fallthru
      _
    // Predicated region
    $region38: #{circular_cnn_forward.1} parent=1 // pred_check
      _
    $region39: #{circular_cnn_forward.1} parent=1 // pred_check_branch
      %65 = sbr.rel (0) target = $region41
    $region40: #{circular_cnn_forward.1} parent=1 // pred_region
      %66 = dma.done [#allocation3], 2048
    $region41: #{circular_cnn_forward.1} parent=1 // pred_fallthru
      _
    // Predicated region
    $region42: #{circular_cnn_forward.1} parent=1 // pred_check
      _
    $region43: #{circular_cnn_forward.1} parent=1 // pred_check_branch
      %68 = sbr.rel (0) target = $region45
    $region44: #{circular_cnn_forward.1} parent=1 // pred_region
      %69 = dma.done [#allocation5], 2048
    $region45: #{circular_cnn_forward.1} parent=1 // pred_fallthru
      _
    // Predicated region
    $region46: #{circular_cnn_forward.1} parent=1 // pred_check
      _
    $region47: #{circular_cnn_forward.1} parent=1 // pred_check_branch
      %71 = sbr.rel (0) target = $region49
    $region48: #{circular_cnn_forward.1} parent=1 // pred_region
      %72 = dma.done [#allocation5], 512
    $region49: #{circular_cnn_forward.1} parent=1 // pred_fallthru
      _
    %v74 = vld [vmem:[%s0] sm:$0xf]
    %v75 = vld [vmem:[%s1] sm:$0xff]
    %v76 = vld [vmem:[%s2] sm:$0x3]
    %v78 = vlaneseq
    %v79 = vshrl.u32 %v78, 7
    %v80 = vsub.s32 0, %v79
    %v81 = vrot.slane %v76, %v80
    %v82 = vlaneseq
    %v83 = vshrl.u32 %v82, 7
    %v84 = vsub.s32 1, %v83
    %v85 = vrot.slane %v76, %v84
    %v89 = vunpack.c.l.b16 %v75
    %v90 = vunpack.c.h.b16 %v75
    %v91 = vpack.c.b16 %v89, %v89
    %v92 = vpack.c.b16 %v90, %v90
    %vm93 = vcmask 64512
    %v95 = vsel %vm93, %v74, 0
    %vm97 = vcmask 1043456
    %v99 = vsel %vm97, %v91, 0
    %v102 = vsel %vm97, %v92, 0
    %104 = vmatprep.subr.bf16.mxu0 0
    %105 = vmatpush1.bf16.msra.mxu0 0
    %106 = vmatprep.subr.bf16.mxu0 0
    %107 = vmatpush1.bf16.msra.mxu0 0
    %108 = vmatprep.subr.bf16.mxu0 0
    %109 = vmatpush1.bf16.msra.mxu0 0
    %110 = vmatprep.subr.bf16.mxu0 0
    %111 = vmatpush1.bf16.msra.mxu0 0
    %112 = vmatprep.subr.bf16.mxu0 0
    %113 = vmatpush1.bf16.msra.mxu0 0
    %114 = vmatprep.subr.bf16.mxu0 0
    %115 = vmatpush1.bf16.msra.mxu0 0
    %116 = vmatprep.subr.bf16.mxu0 0
    %117 = vmatpush1.bf16.msra.mxu0 0
    %118 = vmatprep.subr.bf16.mxu0 %v102
    %119 = vmatpush1.bf16.msra.mxu0 %v99
    %120 = vmatprep.subr.bf16.mxu0 0
    %121 = vmatpush2.bf16.msra.mxu0 0
    %122 = vmatprep.subr.bf16.mxu0 0
    %123 = vmatpush2.bf16.msra.mxu0 0
    %124 = vmatprep.subr.bf16.mxu0 0
    %125 = vmatpush2.bf16.msra.mxu0 0
    %126 = vmatprep.subr.bf16.mxu0 0
    %127 = vmatpush2.bf16.msra.mxu0 0
    %128 = vmatprep.subr.bf16.mxu0 0
    %129 = vmatpush2.bf16.msra.mxu0 0
    %130 = vmatprep.subr.bf16.mxu0 0
    %131 = vmatpush2.bf16.msra.mxu0 0
    %132 = vmatprep.subr.bf16.mxu0 0
    %133 = vmatpush2.bf16.msra.mxu0 0
    %134 = vmatprep.subr.bf16.mxu0 0
    %135 = vmatpush2.bf16.msra.mxu0 0
    %136 = vmatprep.mubr.bf16.mxu0 0
    %137 = vmatmul.mubr.bf16.gmra.mxu0 %v95
    %v138 = vpop.f32.mrf.mxu0
    %v139 = vadd.f32 %v81, %v138
    %v140 = vpop.f32.mrf.mxu0
    %v141 = vadd.f32 %v85, %v140
    %v142 = vpop.f32.mrf.mxu0
    %v143 = vpop.f32.mrf.mxu0
    %144 = vdwg.mxu0
    %v145 = vmax.f32 %v139, 0.0
    %v146 = vmax.f32 %v141, 0.0
    %v147 = vmax.f32 %v145, %v146
    %v148 = vpack.c.bf16 %v147, %v147
    %v149 = vld [vmem:[#allocation2] sm:$0xff]
    %v150 = vld [vmem:[#allocation2 + $0x8] sm:$0xff]
    %v151 = vld [vmem:[#allocation2 + $0x10] sm:$0xff]
    %v152 = vld [vmem:[#allocation2 + $0x18] sm:$0xff]
    %v153 = vld [vmem:[#allocation2 + $0x20] sm:$0xff]
    %v154 = vld [vmem:[#allocation2 + $0x28] sm:$0xff]
    %v155 = vld [vmem:[#allocation2 + $0x30] sm:$0xff]
    %v156 = vld [vmem:[#allocation2 + $0x38] sm:$0xff]
    %v157 = vld [vmem:[#allocation2 + $0x40] sm:$0xff]
    %v158 = vld [vmem:[#allocation2 + $0x48] sm:$0xff]
    %v159 = vld [vmem:[#allocation2 + $0x50] sm:$0xff]
    %v160 = vld [vmem:[#allocation2 + $0x58] sm:$0xff]
    %v161 = vld [vmem:[#allocation2 + $0x60] sm:$0xff]
    %v162 = vld [vmem:[#allocation2 + $0x68] sm:$0xff]
    %v163 = vld [vmem:[#allocation2 + $0x70] sm:$0xff]
    %v164 = vld [vmem:[#allocation2 + $0x78] sm:$0xff]
    %v165 = vld [vmem:[%s4] sm:$0x3]
    %v167 = vlaneseq
    %v168 = vshrl.u32 %v167, 7
    %v169 = vsub.s32 0, %v168
    %v170 = vrot.slane %v165, %v169
    %v171 = vlaneseq
    %v172 = vshrl.u32 %v171, 7
    %v173 = vsub.s32 1, %v172
    %v174 = vrot.slane %v165, %v173
    %v193 = vunpack.c.l.b16 %v149
    %v194 = vunpack.c.h.b16 %v149
    %v195 = vunpack.c.l.b16 %v150
    %v196 = vunpack.c.h.b16 %v150
    %v197 = vunpack.c.l.b16 %v151
    %v198 = vunpack.c.h.b16 %v151
    %v199 = vunpack.c.l.b16 %v152
    %v200 = vunpack.c.h.b16 %v152
    %v201 = vunpack.c.l.b16 %v153
    %v202 = vunpack.c.h.b16 %v153
    %v203 = vunpack.c.l.b16 %v154
    %v204 = vunpack.c.h.b16 %v154
    %v205 = vunpack.c.l.b16 %v155
    %v206 = vunpack.c.h.b16 %v155
    %v207 = vunpack.c.l.b16 %v156
    %v208 = vunpack.c.h.b16 %v156
    %v209 = vunpack.c.l.b16 %v157
    %v210 = vunpack.c.h.b16 %v157
    %v211 = vunpack.c.l.b16 %v158
    %v212 = vunpack.c.h.b16 %v158
    %v213 = vunpack.c.l.b16 %v159
    %v214 = vunpack.c.h.b16 %v159
    %v215 = vunpack.c.l.b16 %v160
    %v216 = vunpack.c.h.b16 %v160
    %v217 = vunpack.c.l.b16 %v161
    %v218 = vunpack.c.h.b16 %v161
    %v219 = vunpack.c.l.b16 %v162
    %v220 = vunpack.c.h.b16 %v162
    %v221 = vunpack.c.l.b16 %v163
    %v222 = vunpack.c.h.b16 %v163
    %v223 = vunpack.c.l.b16 %v164
    %v224 = vunpack.c.h.b16 %v164
    %v225 = vpack.c.b16 %v195, %v193
    %v226 = vpack.c.b16 %v196, %v194
    %v227 = vpack.c.b16 %v199, %v197
    %v228 = vpack.c.b16 %v200, %v198
    %v229 = vpack.c.b16 %v203, %v201
    %v230 = vpack.c.b16 %v204, %v202
    %v231 = vpack.c.b16 %v207, %v205
    %v232 = vpack.c.b16 %v208, %v206
    %v233 = vpack.c.b16 %v211, %v209
    %v234 = vpack.c.b16 %v212, %v210
    %v235 = vpack.c.b16 %v215, %v213
    %v236 = vpack.c.b16 %v216, %v214
    %v237 = vpack.c.b16 %v219, %v217
    %v238 = vpack.c.b16 %v220, %v218
    %v239 = vpack.c.b16 %v223, %v221
    %v240 = vpack.c.b16 %v224, %v222
    %257 = vmatprep.subr.bf16.mxu0 %v240
    %258 = vmatpush1.bf16.msra.mxu0 %v239
    %259 = vmatprep.subr.bf16.mxu0 %v238
    %260 = vmatpush1.bf16.msra.mxu0 %v237
    %261 = vmatprep.subr.bf16.mxu0 %v236
    %262 = vmatpush1.bf16.msra.mxu0 %v235
    %263 = vmatprep.subr.bf16.mxu0 %v234
    %264 = vmatpush1.bf16.msra.mxu0 %v233
    %265 = vmatprep.subr.bf16.mxu0 %v232
    %266 = vmatpush1.bf16.msra.mxu0 %v231
    %267 = vmatprep.subr.bf16.mxu0 %v230
    %268 = vmatpush1.bf16.msra.mxu0 %v229
    %269 = vmatprep.subr.bf16.mxu0 %v228
    %270 = vmatpush1.bf16.msra.mxu0 %v227
    %271 = vmatprep.subr.bf16.mxu0 %v226
    %272 = vmatpush1.bf16.msra.mxu0 %v225
    %273 = vmatprep.subr.bf16.mxu0 0
    %274 = vmatpush2.bf16.msra.mxu0 0
    %275 = vmatprep.subr.bf16.mxu0 0
    %276 = vmatpush2.bf16.msra.mxu0 0
    %277 = vmatprep.subr.bf16.mxu0 0
    %278 = vmatpush2.bf16.msra.mxu0 0
    %279 = vmatprep.subr.bf16.mxu0 0
    %280 = vmatpush2.bf16.msra.mxu0 0
    %281 = vmatprep.subr.bf16.mxu0 0
    %282 = vmatpush2.bf16.msra.mxu0 0
    %283 = vmatprep.subr.bf16.mxu0 0
    %284 = vmatpush2.bf16.msra.mxu0 0
    %285 = vmatprep.subr.bf16.mxu0 0
    %286 = vmatpush2.bf16.msra.mxu0 0
    %287 = vmatprep.subr.bf16.mxu0 0
    %288 = vmatpush2.bf16.msra.mxu0 0
    %289 = vmatprep.mubr.bf16.mxu0 0
    %290 = vmatmul.mubr.bf16.gmra.mxu0 %v148
    %v291 = vpop.f32.mrf.mxu0
    %v292 = vadd.f32 %v170, %v291
    %v293 = vpop.f32.mrf.mxu0
    %v294 = vadd.f32 %v174, %v293
    %v295 = vpop.f32.mrf.mxu0
    %v296 = vpop.f32.mrf.mxu0
    %297 = vdwg.mxu0
    %v298 = vmax.f32 %v292, 0.0
    %v299 = vmax.f32 %v294, 0.0
    %v300 = vpack.c.bf16 %v298, %v298
    %v301 = vpack.c.bf16 %v299, %v299
    %v302 = vld [vmem:[#allocation4] sm:$0xf]
    %v303 = vld [vmem:[#allocation4 + $0x4] sm:$0xf]
    %v304 = vld [vmem:[#allocation4 + $0x8] sm:$0xf]
    %v305 = vld [vmem:[#allocation4 + $0xc] sm:$0xf]
    %v306 = vld [vmem:[#allocation4 + $0x10] sm:$0xf]
    %v307 = vld [vmem:[#allocation4 + $0x14] sm:$0xf]
    %v308 = vld [vmem:[#allocation4 + $0x18] sm:$0xf]
    %v309 = vld [vmem:[#allocation4 + $0x1c] sm:$0xf]
    %v310 = vld [vmem:[#allocation4 + $0x20] sm:$0xf]
    %v311 = vld [vmem:[#allocation4 + $0x24] sm:$0xf]
    %v312 = vld [vmem:[#allocation4 + $0x28] sm:$0xf]
    %v313 = vld [vmem:[#allocation4 + $0x2c] sm:$0xf]
    %v314 = vld [vmem:[#allocation4 + $0x30] sm:$0xf]
    %v315 = vld [vmem:[#allocation4 + $0x34] sm:$0xf]
    %v316 = vld [vmem:[#allocation4 + $0x38] sm:$0xf]
    %v317 = vld [vmem:[#allocation4 + $0x3c] sm:$0xf]
    %v318 = vld [vmem:[#allocation4 + $0x40] sm:$0xf]
    %v319 = vld [vmem:[#allocation4 + $0x44] sm:$0xf]
    %v320 = vld [vmem:[#allocation4 + $0x48] sm:$0xf]
    %v321 = vld [vmem:[#allocation4 + $0x4c] sm:$0xf]
    %v322 = vld [vmem:[#allocation4 + $0x50] sm:$0xf]
    %v323 = vld [vmem:[#allocation4 + $0x54] sm:$0xf]
    %v324 = vld [vmem:[#allocation4 + $0x58] sm:$0xf]
    %v325 = vld [vmem:[#allocation4 + $0x5c] sm:$0xf]
    %v326 = vld [vmem:[#allocation4 + $0x60] sm:$0xf]
    %v327 = vld [vmem:[#allocation4 + $0x64] sm:$0xf]
    %v328 = vld [vmem:[#allocation4 + $0x68] sm:$0xf]
    %v329 = vld [vmem:[#allocation4 + $0x6c] sm:$0xf]
    %v330 = vld [vmem:[#allocation4 + $0x70] sm:$0xf]
    %v331 = vld [vmem:[#allocation4 + $0x74] sm:$0xf]
    %v332 = vld [vmem:[#allocation4 + $0x78] sm:$0xf]
    %v333 = vld [vmem:[#allocation4 + $0x7c] sm:$0xf]
    %v334 = vld [vmem:[%s6] sm:$0x1]
    %v336 = vlaneseq
    %v337 = vshrl.u32 %v336, 7
    %v338 = vsub.s32 0, %v337
    %v339 = vrot.slane %v334, %v338
    %v373 = vunpack.c.l.b16 %v302
    %v374 = vunpack.c.l.b16 %v303
    %v375 = vunpack.c.l.b16 %v304
    %v376 = vunpack.c.l.b16 %v305
    %v377 = vunpack.c.l.b16 %v306
    %v378 = vunpack.c.l.b16 %v307
    %v379 = vunpack.c.l.b16 %v308
    %v380 = vunpack.c.l.b16 %v309
    %v381 = vunpack.c.l.b16 %v310
    %v382 = vunpack.c.l.b16 %v311
    %v383 = vunpack.c.l.b16 %v312
    %v384 = vunpack.c.l.b16 %v313
    %v385 = vunpack.c.l.b16 %v314
    %v386 = vunpack.c.l.b16 %v315
    %v387 = vunpack.c.l.b16 %v316
    %v388 = vunpack.c.l.b16 %v317
    %v389 = vunpack.c.l.b16 %v318
    %v390 = vunpack.c.l.b16 %v319
    %v391 = vunpack.c.l.b16 %v320
    %v392 = vunpack.c.l.b16 %v321
    %v393 = vunpack.c.l.b16 %v322
    %v394 = vunpack.c.l.b16 %v323
    %v395 = vunpack.c.l.b16 %v324
    %v396 = vunpack.c.l.b16 %v325
    %v397 = vunpack.c.l.b16 %v326
    %v398 = vunpack.c.l.b16 %v327
    %v399 = vunpack.c.l.b16 %v328
    %v400 = vunpack.c.l.b16 %v329
    %v401 = vunpack.c.l.b16 %v330
    %v402 = vunpack.c.l.b16 %v331
    %v403 = vunpack.c.l.b16 %v332
    %v404 = vunpack.c.l.b16 %v333
    %v405 = vpack.c.b16 %v374, %v373
    %v406 = vpack.c.b16 %v376, %v375
    %v407 = vpack.c.b16 %v378, %v377
    %v408 = vpack.c.b16 %v380, %v379
    %v409 = vpack.c.b16 %v382, %v381
    %v410 = vpack.c.b16 %v384, %v383
    %v411 = vpack.c.b16 %v386, %v385
    %v412 = vpack.c.b16 %v388, %v387
    %v413 = vpack.c.b16 %v390, %v389
    %v414 = vpack.c.b16 %v392, %v391
    %v415 = vpack.c.b16 %v394, %v393
    %v416 = vpack.c.b16 %v396, %v395
    %v417 = vpack.c.b16 %v398, %v397
    %v418 = vpack.c.b16 %v400, %v399
    %v419 = vpack.c.b16 %v402, %v401
    %v420 = vpack.c.b16 %v404, %v403
    %437 = vmatprep.subr.bf16.mxu0 0
    %438 = vmatpush1.bf16.msra.mxu0 %v412
    %439 = vmatprep.subr.bf16.mxu0 0
    %440 = vmatpush1.bf16.msra.mxu0 %v411
    %441 = vmatprep.subr.bf16.mxu0 0
    %442 = vmatpush1.bf16.msra.mxu0 %v410
    %443 = vmatprep.subr.bf16.mxu0 0
    %444 = vmatpush1.bf16.msra.mxu0 %v409
    %445 = vmatprep.subr.bf16.mxu0 0
    %446 = vmatpush1.bf16.msra.mxu0 %v408
    %447 = vmatprep.subr.bf16.mxu0 0
    %448 = vmatpush1.bf16.msra.mxu0 %v407
    %449 = vmatprep.subr.bf16.mxu0 0
    %450 = vmatpush1.bf16.msra.mxu0 %v406
    %451 = vmatprep.subr.bf16.mxu0 0
    %452 = vmatpush1.bf16.msra.mxu0 %v405
    %453 = vmatprep.subr.bf16.mxu0 0
    %454 = vmatpush2.bf16.msra.mxu0 %v420
    %455 = vmatprep.subr.bf16.mxu0 0
    %456 = vmatpush2.bf16.msra.mxu0 %v419
    %457 = vmatprep.subr.bf16.mxu0 0
    %458 = vmatpush2.bf16.msra.mxu0 %v418
    %459 = vmatprep.subr.bf16.mxu0 0
    %460 = vmatpush2.bf16.msra.mxu0 %v417
    %461 = vmatprep.subr.bf16.mxu0 0
    %462 = vmatpush2.bf16.msra.mxu0 %v416
    %463 = vmatprep.subr.bf16.mxu0 0
    %464 = vmatpush2.bf16.msra.mxu0 %v415
    %465 = vmatprep.subr.bf16.mxu0 0
    %466 = vmatpush2.bf16.msra.mxu0 %v414
    %467 = vmatprep.subr.bf16.mxu0 0
    %468 = vmatpush2.bf16.msra.mxu0 %v413
    %469 = vmatprep.mubr.bf16.mxu0 %v301
    %470 = vmatmul.mubr.bf16.gmra.mxu0 %v300
    %v471 = vpop.f32.mrf.mxu0
    %v472 = vadd.f32 %v339, %v471
    %v473 = vpop.f32.mrf.mxu0
    %v474 = vpop.f32.mrf.mxu0
    %v475 = vpop.f32.mrf.mxu0
    %476 = vdwg.mxu0
    %v477 = vmax.f32 %v472, 0.0
    %v478 = vpack.c.bf16 %v477, %v477
    %v479 = vld [vmem:[#allocation6] sm:$0xf]
    %v480 = vld [vmem:[#allocation6 + $0x4] sm:$0xf]
    %v481 = vld [vmem:[#allocation6 + $0x8] sm:$0xf]
    %v482 = vld [vmem:[#allocation6 + $0xc] sm:$0xf]
    %v483 = vld [vmem:[#allocation6 + $0x10] sm:$0xf]
    %v484 = vld [vmem:[#allocation6 + $0x14] sm:$0xf]
    %v485 = vld [vmem:[#allocation6 + $0x18] sm:$0xf]
    %v486 = vld [vmem:[#allocation6 + $0x1c] sm:$0xf]
    %v487 = vld [vmem:[%s8] sm:$0x1]
    %v489 = vlaneseq
    %v490 = vshrl.u32 %v489, 7
    %v491 = vsub.s32 0, %v490
    %v492 = vrot.slane %v487, %v491
    %v502 = vunpack.c.l.b16 %v479
    %v503 = vunpack.c.l.b16 %v480
    %v504 = vunpack.c.l.b16 %v481
    %v505 = vunpack.c.l.b16 %v482
    %v506 = vunpack.c.l.b16 %v483
    %v507 = vunpack.c.l.b16 %v484
    %v508 = vunpack.c.l.b16 %v485
    %v509 = vunpack.c.l.b16 %v486
    %v510 = vpack.c.b16 %v503, %v502
    %v511 = vpack.c.b16 %v505, %v504
    %v512 = vpack.c.b16 %v507, %v506
    %v513 = vpack.c.b16 %v509, %v508
    %vm518 = vcmask 523264
    %v520 = vsel %vm518, %v478, 0
    %522 = vmatprep.subr.bf16.mxu0 0
    %523 = vmatpush1.bf16.msra.mxu0 0
    %524 = vmatprep.subr.bf16.mxu0 0
    %525 = vmatpush1.bf16.msra.mxu0 0
    %526 = vmatprep.subr.bf16.mxu0 0
    %527 = vmatpush1.bf16.msra.mxu0 0
    %528 = vmatprep.subr.bf16.mxu0 0
    %529 = vmatpush1.bf16.msra.mxu0 0
    %530 = vmatprep.subr.bf16.mxu0 0
    %531 = vmatpush1.bf16.msra.mxu0 %v513
    %532 = vmatprep.subr.bf16.mxu0 0
    %533 = vmatpush1.bf16.msra.mxu0 %v512
    %534 = vmatprep.subr.bf16.mxu0 0
    %535 = vmatpush1.bf16.msra.mxu0 %v511
    %536 = vmatprep.subr.bf16.mxu0 0
    %537 = vmatpush1.bf16.msra.mxu0 %v510
    %538 = vmatprep.subr.bf16.mxu0 0
    %539 = vmatpush2.bf16.msra.mxu0 0
    %540 = vmatprep.subr.bf16.mxu0 0
    %541 = vmatpush2.bf16.msra.mxu0 0
    %542 = vmatprep.subr.bf16.mxu0 0
    %543 = vmatpush2.bf16.msra.mxu0 0
    %544 = vmatprep.subr.bf16.mxu0 0
    %545 = vmatpush2.bf16.msra.mxu0 0
    %546 = vmatprep.subr.bf16.mxu0 0
    %547 = vmatpush2.bf16.msra.mxu0 0
    %548 = vmatprep.subr.bf16.mxu0 0
    %549 = vmatpush2.bf16.msra.mxu0 0
    %550 = vmatprep.subr.bf16.mxu0 0
    %551 = vmatpush2.bf16.msra.mxu0 0
    %552 = vmatprep.subr.bf16.mxu0 0
    %553 = vmatpush2.bf16.msra.mxu0 0
    %554 = vmatprep.mubr.bf16.mxu0 0
    %555 = vmatmul.mubr.bf16.gmra.mxu0 %v520
    %v556 = vpop.f32.mrf.mxu0
    %v557 = vadd.f32 %v492, %v556
    %v558 = vpop.f32.mrf.mxu0
    %v559 = vpop.f32.mrf.mxu0
    %v560 = vpop.f32.mrf.mxu0
    %561 = vdwg.mxu0
    %562 = vst.msk [vmem:[%s9] sm:$0xff] %vm93, %v557
    // Predicated region
    $region50: #{circular_cnn_forward.1} parent=1 // pred_check
      _
    $region51: #{circular_cnn_forward.1} parent=1 // pred_check_branch
      %564 = sbr.rel (0) target = $region53
    $region52: #{circular_cnn_forward.1} parent=1 // pred_region
      _
    $region53: #{circular_cnn_forward.1} parent=1 // pred_fallthru
      _
    // Predicated region
    $region54: #{circular_cnn_forward.1} parent=1 // pred_check
      _
    $region55: #{circular_cnn_forward.1} parent=1 // pred_check_branch
      %566 = sbr.rel (0) target = $region57
    $region56: #{circular_cnn_forward.1} parent=1 // pred_region
      _
    $region57: #{circular_cnn_forward.1} parent=1 // pred_fallthru
      _
    %567 = vsyncpa [#allocation3], 1
    %568 = vsyncpa [#allocation5], 1

</llo_original>
